<compile_context>
chip_gen: v7x
topology: tpu7x:2x2x1
jax: 0.10.0
libtpu: 0.0.40
codegen_flags: <defaults>
</compile_context>

<pallas_src>
import functools

import jax
import jax.numpy as jnp
from jax.experimental import pallas as pl
from jax.experimental.pallas import tpu as pltpu

LANES = 128
SUBLANES = 8
MAX_BLOCK_ROWS = 4096   # (4096,128) f32 tile = 2 MiB; 2 inputs x 2 buffers = 8 MiB VMEM


def _cdiv(a, b):
    return (a + b - 1) // b


def _round_up(a, b):
    return _cdiv(a, b) * b


def _num_tensorcores():
    # v7x has 2 TensorCores per chip; v5e / v6e have 1. Fall back to 1 if unknown.
    try:
        kind = jax.devices()[0].device_kind.lower()
    except Exception:
        return 1
    return 2 if ("v7" in kind or "7x" in kind) else 1


def _focal_sum_kernel(rows_ref, x_ref, t_ref, out_ref, acc_ref, *,
                      gamma, block_rows, blocks_per_core, binary_targets):
    c = pl.program_id(0)          # per-TensorCore partial (size 1 on v5e/v6e)
    j = pl.program_id(1)          # reduction over row-blocks
    nj = pl.num_programs(1)

    @pl.when(j == 0)
    def _():
        acc_ref[...] = jnp.zeros_like(acc_ref)

    x = x_ref[...].astype(jnp.float32)
    t = t_ref[...].astype(jnp.float32)

    if binary_targets:
        # For t in {0,1}:  z = (2t-1)*x,  bce = softplus(-z),  pt = sigmoid(z).
        # Two transcendentals (exp, log1p) + an approx reciprocal instead of
        # exp / log1p / exp.
        z = (2.0 * t - 1.0) * x
        e = jnp.exp(-jnp.abs(z))
        bce = jnp.maximum(-z, 0.0) + jnp.log1p(e)
        one_m_pt = jnp.where(z >= 0.0, e, 1.0) * pl.reciprocal(1.0 + e, approx=True)
    else:
        # Soft-target fallback: exact BCEWithLogits + pt = exp(-bce).
        bce = jnp.maximum(x, 0.0) - x * t + jnp.log1p(jnp.exp(-jnp.abs(x)))
        pt = jnp.exp(-bce)
        one_m_pt = jnp.maximum(1.0 - pt, 0.0)

    g = float(gamma)
    if g == float(int(g)) and int(g) >= 0:
        gi = int(g)
        if gi == 0:
            focal = bce
        else:
            mod = one_m_pt
            for _ in range(gi - 1):        # gamma=2 -> a single extra multiply
                mod = mod * one_m_pt
            focal = mod * bce
    else:
        focal = (one_m_pt ** jnp.float32(g)) * bce

    def _fold(v):
        # (block_rows,128) -> (8,128): layout-preserving reshape, cross-vreg VPU adds.
        return v.reshape(block_rows // SUBLANES, SUBLANES, LANES).sum(axis=0)

    row0 = (c * blocks_per_core + j) * block_rows
    n_rows = rows_ref[0]
    block_fully_valid = row0 + block_rows <= n_rows

    @pl.when(block_fully_valid)
    def _():
        acc_ref[...] += _fold(focal)

    @pl.when(jnp.logical_not(block_fully_valid))
    def _():
        # Only the block straddling the end of the data pays for the mask.
        rid = row0 + jax.lax.broadcasted_iota(jnp.int32, (block_rows, LANES), 0)
        acc_ref[...] += _fold(jnp.where(rid < n_rows, focal, 0.0))

    @pl.when(j == nj - 1)
    def _():
        out_ref[...] = acc_ref[...]


def focal_loss(inputs, targets, alpha=1.0, gamma=2.0, reduction="mean",
               binary_targets=True):
    """Focal loss on logits; matches the PyTorch FocalLoss module for
    reduction in {'mean','sum'}. Set binary_targets=False for soft labels."""
    assert inputs.shape == targets.shape
    if reduction not in ("mean", "sum"):
        # TODO(synk): reduction='none' would need an elementwise-output kernel;
        # the module default ('mean') and 'sum' are implemented here.
        raise NotImplementedError("reduction='none' not implemented in Pallas path")

    n_elems = int(inputs.size)
    x = inputs.reshape(-1)
    t = targets.reshape(-1)

    rem = n_elems % LANES
    if rem:
        # Lane-ragged case only: pad the final (<128-elem) row with neutral values
        # (x=+40, t=1 => focal underflows to 0), so no lane mask is needed in-kernel.
        pad = LANES - rem
        x = jnp.concatenate([x, jnp.full((pad,), 40.0, x.dtype)])
        t = jnp.concatenate([t, jnp.ones((pad,), t.dtype)])
    rows = _cdiv(n_elems, LANES)
    x2 = x.reshape(rows, LANES)
    t2 = t.reshape(rows, LANES)

    block_rows = min(MAX_BLOCK_ROWS, _round_up(rows, SUBLANES))
    total_blocks = _cdiv(rows, block_rows)

    num_cores = _num_tensorcores()
    if total_blocks < num_cores:
        num_cores = 1
    blocks_per_core = _cdiv(total_blocks, num_cores)
    last_block = total_blocks - 1

    if num_cores * blocks_per_core == total_blocks:
        def in_index(c, j, rows_smem):
            return (c * blocks_per_core + j, 0)
    else:
        # Uneven 2-core split: clamp the trailing (fully out-of-range) block onto
        # the last real block; the in-kernel row mask zeroes its contribution.
        def in_index(c, j, rows_smem):
            return (jnp.minimum(c * blocks_per_core + j, last_block), 0)

    in_block = pl.BlockSpec((block_rows, LANES), in_index)

    kernel = functools.partial(
        _focal_sum_kernel,
        gamma=float(gamma),
        block_rows=block_rows,
        blocks_per_core=blocks_per_core,
        binary_targets=bool(binary_targets),
    )

    dim0_sem = pltpu.CORE_PARALLEL if num_cores > 1 else pltpu.ARBITRARY

    partials = pl.pallas_call(
        kernel,
        out_shape=jax.ShapeDtypeStruct((num_cores * SUBLANES, LANES), jnp.float32),
        grid_spec=pltpu.PrefetchScalarGridSpec(
            num_scalar_prefetch=1,
            grid=(num_cores, blocks_per_core),
            in_specs=[in_block, in_block],
            out_specs=pl.BlockSpec((SUBLANES, LANES), lambda c, j, rows_smem: (c, 0)),
            scratch_shapes=[pltpu.VMEM((SUBLANES, LANES), jnp.float32)],
        ),
        compiler_params=pltpu.CompilerParams(
            dimension_semantics=(dim0_sem, pltpu.ARBITRARY),
            vmem_limit_bytes=32 * 1024 * 1024,
        ),
    )(jnp.array([rows], jnp.int32), x2, t2)

    total = jnp.float32(alpha) * jnp.sum(partials)   # alpha folded out of the kernel
    if reduction == "mean":
        return total / jnp.float32(n_elems)
    return total


if __name__ == "__main__":
    key = jax.random.PRNGKey(0)
    k1, k2 = jax.random.split(key)

    # Small NCHW-like shape consistent with a typical use of this loss.
    shape = (2, 4, 16, 16)
    logits = jax.random.normal(k1, shape, dtype=jnp.float32)
    targets = (jax.random.uniform(k2, shape) > 0.5).astype(jnp.float32)

    # Fast (binary-target) path and exact soft-target fallback path.
    out_fast = focal_loss(logits, targets, alpha=1.0, gamma=2.0, reduction="mean")
    out_exact = focal_loss(logits, targets, alpha=1.0, gamma=2.0, reduction="mean",
                           binary_targets=False)
    out_fast, out_exact = jax.block_until_ready((out_fast, out_exact))

    # Plain-JAX reference of the PyTorch math.
    bce = jnp.maximum(logits, 0.0) - logits * targets + jnp.log1p(jnp.exp(-jnp.abs(logits)))
    pt = jnp.exp(-bce)
    ref = jnp.mean(1.0 * (1.0 - pt) ** 2 * bce)

    assert jnp.allclose(out_exact, ref, rtol=1e-5, atol=1e-6), (out_exact, ref)
    # Fast path uses an approximate EUP reciprocal -> slightly looser tolerance.
    assert jnp.allclose(out_fast, ref, rtol=1e-2, atol=1e-4), (out_fast, ref)

    print("KERNEL_OK")
</pallas_src>

<mosaic_0001>
module attributes {stable_mosaic.version = 11 : i64} {
  func.func @_focal_sum_kernel(%arg0: i32, %arg1: i32, %arg2: memref<1xi32, #tpu.memory_space<smem>>, %arg3: memref<16x128xf32, #tpu.memory_space<vmem>>, %arg4: memref<16x128xf32, #tpu.memory_space<vmem>>, %arg5: memref<8x128xf32, #tpu.memory_space<vmem>>, %arg6: memref<8x128xf32, #tpu.memory_space<vmem>>) attributes {dimension_semantics = [#tpu.dimension_semantics<arbitrary>, #tpu.dimension_semantics<arbitrary>], iteration_bounds = array<i64: 1, 1>, scalar_prefetch = 1 : i64, scratch_operands = 1 : i64, tpu.core_type = #tpu.core_type<tc>, window_params = [{transform_indices = @transform_0, window_bounds = array<i64: 16, 128>}, {transform_indices = @transform_1, window_bounds = array<i64: 16, 128>}, {transform_indices = @transform_2, window_bounds = array<i64: 8, 128>}]} {
    %c0_i32 = arith.constant 0 : i32
    %0 = arith.cmpi eq, %arg1, %c0_i32 : i32
    %1 = arith.extui %0 : i1 to i32
    %c0_i32_0 = arith.constant 0 : i32
    %2 = arith.cmpi ne, %1, %c0_i32_0 : i32
    scf.if %2 {
      %cst_17 = arith.constant 0.000000e+00 : f32
      %44 = vector.broadcast %cst_17 : f32 to vector<8x128xf32>
      %c0_18 = arith.constant 0 : index
      %c0_19 = arith.constant 0 : index
      %45 = vector.load %arg6[%c0_18, %c0_19] : memref<8x128xf32, #tpu.memory_space<vmem>>, vector<8x128xf32>
      tpu.vector_store %arg6[%c0_18, %c0_19], %44 {strides = array<i32>} : memref<8x128xf32, #tpu.memory_space<vmem>>, vector<8x128xf32>,
    } else {
    }
    %c0 = arith.constant 0 : index
    %c0_1 = arith.constant 0 : index
    %3 = vector.load %arg3[%c0, %c0_1] : memref<16x128xf32, #tpu.memory_space<vmem>>, vector<16x128xf32>
    %c0_2 = arith.constant 0 : index
    %c0_3 = arith.constant 0 : index
    %4 = vector.load %arg4[%c0_2, %c0_3] : memref<16x128xf32, #tpu.memory_space<vmem>>, vector<16x128xf32>
    %cst = arith.constant 2.000000e+00 : f32
    %5 = vector.broadcast %cst : f32 to vector<16x128xf32>
    %6 = arith.mulf %5, %4 : vector<16x128xf32>
    %cst_4 = arith.constant 1.000000e+00 : f32
    %7 = vector.broadcast %cst_4 : f32 to vector<16x128xf32>
    %8 = arith.subf %6, %7 : vector<16x128xf32>
    %9 = arith.mulf %8, %3 : vector<16x128xf32>
    %10 = math.absf %9 : vector<16x128xf32>
    %cst_5 = arith.constant 0.000000e+00 : f32
    %11 = vector.broadcast %cst_5 : f32 to vector<16x128xf32>
    %12 = arith.subf %11, %10 : vector<16x128xf32>
    %13 = math.exp %12 : vector<16x128xf32>
    %cst_6 = arith.constant 0.000000e+00 : f32
    %14 = vector.broadcast %cst_6 : f32 to vector<16x128xf32>
    %15 = arith.subf %14, %9 : vector<16x128xf32>
    %cst_7 = arith.constant 0.000000e+00 : f32
    %16 = vector.broadcast %cst_7 : f32 to vector<16x128xf32>
    %17 = arith.maximumf %15, %16 : vector<16x128xf32>
    %18 = math.log1p %13 : vector<16x128xf32>
    %19 = arith.addf %17, %18 : vector<16x128xf32>
    %cst_8 = arith.constant 0.000000e+00 : f32
    %20 = vector.broadcast %cst_8 : f32 to vector<16x128xf32>
    %21 = arith.cmpf oge, %9, %20 : vector<16x128xf32>
    %cst_9 = arith.constant 1.000000e+00 : f32
    %22 = vector.broadcast %cst_9 : f32 to vector<16x128xf32>
    %23 = arith.select %21, %13, %22 : vector<16x128xi1>, vector<16x128xf32>
    %cst_10 = arith.constant 1.000000e+00 : f32
    %24 = vector.broadcast %cst_10 : f32 to vector<16x128xf32>
    %25 = arith.addf %24, %13 : vector<16x128xf32>
    %26 = tpu.reciprocal %25 {approx = true} : vector<16x128xf32> -> vector<16x128xf32>
    %27 = arith.mulf %23, %26 : vector<16x128xf32>
    %28 = arith.mulf %27, %27 : vector<16x128xf32>
    %29 = arith.mulf %28, %19 : vector<16x128xf32>
    %c1_i32 = arith.constant 1 : i32
    %30 = arith.muli %arg0, %c1_i32 : i32
    %31 = arith.addi %30, %arg1 : i32
    %c16_i32 = arith.constant 16 : i32
    %32 = arith.muli %31, %c16_i32 : i32
    %c0_11 = arith.constant 0 : index
    %33 = memref.load %arg2[%c0_11] : memref<1xi32, #tpu.memory_space<smem>>
    %c16_i32_12 = arith.constant 16 : i32
    %34 = arith.addi %32, %c16_i32_12 : i32
    %35 = arith.cmpi sle, %34, %33 : i32
    %36 = arith.extui %35 : i1 to i32
    %c0_i32_13 = arith.constant 0 : i32
    %37 = arith.cmpi ne, %36, %c0_i32_13 : i32
    scf.if %37 {
      %c0_17 = arith.constant 0 : index
      %c0_18 = arith.constant 0 : index
      %44 = vector.load %arg6[%c0_17, %c0_18] : memref<8x128xf32, #tpu.memory_space<vmem>>, vector<8x128xf32>
      %45 = vector.shape_cast %29 : vector<16x128xf32> to vector<2x8x128xf32>
      %cst_19 = arith.constant dense<0.000000e+00> : vector<8x128xf32>
      %46 = vector.multi_reduction <add>, %45, %cst_19 [0] : vector<2x8x128xf32> to vector<8x128xf32>
      %47 = arith.addf %44, %46 : vector<8x128xf32>
      %c0_20 = arith.constant 0 : index
      %c0_21 = arith.constant 0 : index
      %48 = vector.load %arg6[%c0_20, %c0_21] : memref<8x128xf32, #tpu.memory_space<vmem>>, vector<8x128xf32>
      tpu.vector_store %arg6[%c0_20, %c0_21], %47 {strides = array<i32>} : memref<8x128xf32, #tpu.memory_space<vmem>>, vector<8x128xf32>,
    } else {
    }
    %true = arith.constant true
    %38 = arith.xori %35, %true : i1
    %39 = arith.extui %38 : i1 to i32
    %c0_i32_14 = arith.constant 0 : i32
    %40 = arith.cmpi ne, %39, %c0_i32_14 : i32
    scf.if %40 {
      %44 = tpu.iota {dimensions = array<i32: 0>} : vector<16x128xi32>
      %45 = vector.broadcast %32 : i32 to vector<16x128xi32>
      %46 = arith.addi %45, %44 : vector<16x128xi32>
      %c0_17 = arith.constant 0 : index
      %c0_18 = arith.constant 0 : index
      %47 = vector.load %arg6[%c0_17, %c0_18] : memref<8x128xf32, #tpu.memory_space<vmem>>, vector<8x128xf32>
      %48 = vector.broadcast %33 : i32 to vector<16x128xi32>
      %49 = arith.cmpi slt, %46, %48 : vector<16x128xi32>
      %cst_19 = arith.constant 0.000000e+00 : f32
      %50 = vector.broadcast %cst_19 : f32 to vector<16x128xf32>
      %51 = arith.select %49, %29, %50 : vector<16x128xi1>, vector<16x128xf32>
      %52 = vector.shape_cast %51 : vector<16x128xf32> to vector<2x8x128xf32>
      %cst_20 = arith.constant dense<0.000000e+00> : vector<8x128xf32>
      %53 = vector.multi_reduction <add>, %52, %cst_20 [0] : vector<2x8x128xf32> to vector<8x128xf32>
      %54 = arith.addf %47, %53 : vector<8x128xf32>
      %c0_21 = arith.constant 0 : index
      %c0_22 = arith.constant 0 : index
      %55 = vector.load %arg6[%c0_21, %c0_22] : memref<8x128xf32, #tpu.memory_space<vmem>>, vector<8x128xf32>
      tpu.vector_store %arg6[%c0_21, %c0_22], %54 {strides = array<i32>} : memref<8x128xf32, #tpu.memory_space<vmem>>, vector<8x128xf32>,
    } else {
    }
    %c0_i32_15 = arith.constant 0 : i32
    %41 = arith.cmpi eq, %arg1, %c0_i32_15 : i32
    %42 = arith.extui %41 : i1 to i32
    %c0_i32_16 = arith.constant 0 : i32
    %43 = arith.cmpi ne, %42, %c0_i32_16 : i32
    scf.if %43 {
      %c0_17 = arith.constant 0 : index
      %c0_18 = arith.constant 0 : index
      %44 = vector.load %arg6[%c0_17, %c0_18] : memref<8x128xf32, #tpu.memory_space<vmem>>, vector<8x128xf32>
      %c0_19 = arith.constant 0 : index
      %c0_20 = arith.constant 0 : index
      %45 = vector.load %arg5[%c0_19, %c0_20] : memref<8x128xf32, #tpu.memory_space<vmem>>, vector<8x128xf32>
      tpu.vector_store %arg5[%c0_19, %c0_20], %44 {strides = array<i32>} : memref<8x128xf32, #tpu.memory_space<vmem>>, vector<8x128xf32>,
    } else {
    }
    return
  }
  func.func @transform_0(%arg0: i32, %arg1: i32, %arg2: memref<1xi32, #tpu.memory_space<smem>>) -> (i32, i32) {
    %c1_i32 = arith.constant 1 : i32
    %0 = arith.muli %arg0, %c1_i32 : i32
    %1 = arith.addi %0, %arg1 : i32
    %c0_i32 = arith.constant 0 : i32
    %c0_i32_0 = arith.constant 0 : i32
    return %1, %c0_i32 : i32, i32
  }
  func.func @transform_1(%arg0: i32, %arg1: i32, %arg2: memref<1xi32, #tpu.memory_space<smem>>) -> (i32, i32) {
    %c1_i32 = arith.constant 1 : i32
    %0 = arith.muli %arg0, %c1_i32 : i32
    %1 = arith.addi %0, %arg1 : i32
    %c0_i32 = arith.constant 0 : i32
    %c0_i32_0 = arith.constant 0 : i32
    return %1, %c0_i32 : i32, i32
  }
  func.func @transform_2(%arg0: i32, %arg1: i32, %arg2: memref<1xi32, #tpu.memory_space<smem>>) -> (i32, i32) {
    %c0_i32 = arith.constant 0 : i32
    %c0_i32_0 = arith.constant 0 : i32
    return %arg0, %c0_i32 : i32, i32
  }
}

</mosaic_0001>

<llo_original>
// kernel: tpu_custom_call.1
$region0: #{tpu_custom_call.1}
  #allocation0 [shape = 'u32[]', space=smem, size = 0x4, offset = 0x4, fixed_abs, tag = 'smem constant byte address 0x4 - core index']
  #allocation1 [shape = 'u32[144,128]{1,0:T(1,128)}', space=vmem, size = 0x12000, scoped, tag = 'internal scratch']
  #allocation2 [shape = 'f32[8,128]{1,0:T(8,128)}', space=vmem, size = 0x1000, scoped, tag = 'scratch operand']
  #allocation3 [shape = 's32[1]{0}', space=sflag, size = 0x4, scoped, tag = 'scoped memory for tpu_custom_call.1']
  #allocation4 [shape = 's32[1]{0:T(128)S(6)}', space=smem, size = 0x200, scoped, tag = 'prefetched SMEM operand 0']
  %s0 = inlined_call_operand.<no memory space> [shape: s32[1], index: 0, kind: input, shape index: {}]
  %s1 = inlined_call_operand.hbm [shape: f32[16,128], index: 1, kind: input, shape index: {}]
  %s2 = inlined_call_operand.hbm [shape: f32[16,128], index: 2, kind: input, shape index: {}]
  %s3 = inlined_call_operand.hbm [shape: f32[8,128], index: 3, kind: output, shape index: {}]
  %s4 = sld [smem:[#allocation0]]
  $region42: #{tpu_custom_call.1} parent=0
    _
  %s6 = ssub.s32 1, %s4
  %s7 = scalar_select 0, %s6, %s4
  %8 = sst [smem:[#allocation4]] %s0
  $region1: #{tpu_custom_call.1} parent=0
    #allocation5 [shape = 'u8[8192]{0}', space=vmem, size = 0x2000, scoped, tag = 'input window, operand 1, single buffered']
    #allocation6 [shape = 's32[1]{0}', space=sflag, size = 0x4, scoped, tag = 'scoped memory for tpu_custom_call.1']
    #allocation7 [shape = 's32[1]{0}', space=sflag, size = 0x4, scoped, tag = 'scoped memory for tpu_custom_call.1']
    #allocation8 [shape = 'u8[8192]{0}', space=vmem, size = 0x2000, scoped, tag = 'input window, operand 2, single buffered']
    #allocation9 [shape = 's32[1]{0}', space=sflag, size = 0x4, scoped, tag = 'scoped memory for tpu_custom_call.1']
    #allocation10 [shape = 'u8[4096]{0}', space=vmem, size = 0x1000, scoped, tag = 'output window, operand 0, single buffered']
    %9 = vsyncpa [#allocation6], 0
    %10 = vsyncpa [#allocation9], 0
    %11 = vsyncpa [#allocation7], 0
    // Predicated region
    $region2: #{tpu_custom_call.1} parent=1 // pred_check
      _
    $region3: #{tpu_custom_call.1} parent=1 // pred_check_branch
      %13 = sbr.rel (0) target = $region5
    $region4: #{tpu_custom_call.1} parent=1 // pred_region
      %s14 = sadd.s32 0, 0
      %s15 = smul.u32 2, %s14
      %s17 = ssub.s32 256, 256
      %18 = vsyncadd [#allocation6], %s17
      %s19 = smul.addr %s15, 128
      %s20 = scalar_lea.hbm %s1, %s19
      %s21 = sshll.u32 [#allocation5], 4
      %s22 = int_to_ptr.vmem [resolvable:$true] %s21
      %27 = dma.hbm_to_vmem [thread:$0]  %s20, 256, %s22, [#allocation6], 128, 128, 8
    $region5: #{tpu_custom_call.1} parent=1 // pred_fallthru
      _
    // Predicated region
    $region6: #{tpu_custom_call.1} parent=1 // pred_check
      _
    $region7: #{tpu_custom_call.1} parent=1 // pred_check_branch
      %29 = sbr.rel (0) target = $region9
    $region8: #{tpu_custom_call.1} parent=1 // pred_region
      %s30 = sadd.s32 0, 0
      %s31 = smul.u32 2, %s30
      %s33 = ssub.s32 256, 256
      %34 = vsyncadd [#allocation9], %s33
      %s35 = smul.addr %s31, 128
      %s36 = scalar_lea.hbm %s2, %s35
      %s37 = sshll.u32 [#allocation8], 4
      %s38 = int_to_ptr.vmem [resolvable:$true] %s37
      %43 = dma.hbm_to_vmem [thread:$0]  %s36, 256, %s38, [#allocation9], 128, 128, 8
    $region9: #{tpu_custom_call.1} parent=1 // pred_fallthru
      _
    // Predicated region
    $region10: #{tpu_custom_call.1} parent=1 // pred_check
      _
    $region11: #{tpu_custom_call.1} parent=1 // pred_check_branch
      %45 = sbr.rel (0) target = $region13
    $region12: #{tpu_custom_call.1} parent=1 // pred_region
      %46 = dma.done [#allocation6], 256
    $region13: #{tpu_custom_call.1} parent=1 // pred_fallthru
      _
    // Predicated region
    $region14: #{tpu_custom_call.1} parent=1 // pred_check
      _
    $region15: #{tpu_custom_call.1} parent=1 // pred_check_branch
      %48 = sbr.rel (0) target = $region17
    $region16: #{tpu_custom_call.1} parent=1 // pred_region
      %49 = dma.done [#allocation9], 256
    $region17: #{tpu_custom_call.1} parent=1 // pred_fallthru
      _
    %s50 = sadd.s32 0, 0
    %s51 = smul.u32 2, %s50
    %s52 = sadd.s32 0, 0
    %s53 = smul.u32 2, %s52
    %p54 = scmp.eq.s32.totalorder 0, 0
    // Predicated region
    $region18: #{tpu_custom_call.1} parent=1 // pred_check
      %p55 = pneg %p54
    $region19: #{tpu_custom_call.1} parent=1 // pred_check_branch
      %57 = sbr.rel (%p55) target = $region21
    $region20: #{tpu_custom_call.1} parent=1 // pred_region
      %58 = vst [vmem:[#allocation2] sm:$0xff] 0.0
    $region21: #{tpu_custom_call.1} parent=1 // pred_fallthru
      _
    %v59 = vld [vmem:[#allocation5] sm:$0xff]
    %v60 = vld [vmem:[#allocation5 + $0x8] sm:$0xff]
    %v61 = vld [vmem:[#allocation8] sm:$0xff]
    %v62 = vld [vmem:[#allocation8 + $0x8] sm:$0xff]
    %v63 = vmul.f32 %v61, 2.0
    %v64 = vmul.f32 %v62, 2.0
    %v65 = vsub.f32 %v63, 1.0
    %v66 = vsub.f32 %v64, 1.0
    %v67 = vmul.f32 %v65, %v59
    %v68 = vmul.f32 %v66, %v60
    %v69 = vand.u32 2147483647, %v67
    %v70 = vand.u32 2147483647, %v68
    %v71 = vsub.f32 0.0, %v69
    %v72 = vsub.f32 0.0, %v70
    %v73 = vmul.f32 %v71, 1.442695
    %v74 = vpow.pop %v73
    %v75 = vmul.f32 %v72, 1.442695
    %v76 = vpow.pop %v75
    %v77 = vsub.f32 0.0, %v67
    %v78 = vsub.f32 0.0, %v68
    %v79 = vmax.f32 %v77, 0.0
    %v80 = vmax.f32 %v78, 0.0
    %v81 = vadd.f32 %v74, 1.0
    %v82 = vlog2.pop %v81
    %v83 = vmul.f32 %v82, 0.6931472
    %v84 = vmul.f32 -0.5, %v74
    %v85 = vadd.f32 %v84, 1.0
    %v86 = vmul.f32 %v85, %v74
    %v87 = vand.u32 2147483647, %v74
    %vm88 = vcmp.lt.f32.partialorder %v87, 0.0004427343
    %v89 = vsel %vm88, %v86, %v83
    %v90 = vadd.f32 %v76, 1.0
    %v91 = vlog2.pop %v90
    %v92 = vmul.f32 %v91, 0.6931472
    %v93 = vmul.f32 -0.5, %v76
    %v94 = vadd.f32 %v93, 1.0
    %v95 = vmul.f32 %v94, %v76
    %v96 = vand.u32 2147483647, %v76
    %vm97 = vcmp.lt.f32.partialorder %v96, 0.0004427343
    %v98 = vsel %vm97, %v95, %v92
    %v99 = vadd.f32 %v79, %v89
    %v100 = vadd.f32 %v80, %v98
    %vm101 = vcmp.ge.f32.partialorder %v67, 0.0
    %vm102 = vcmp.ge.f32.partialorder %v68, 0.0
    %v103 = vsel %vm101, %v74, 1.0
    %v104 = vsel %vm102, %v76, 1.0
    %v105 = vadd.f32 %v74, 1.0
    %v106 = vadd.f32 %v76, 1.0
    %v107 = vrcp.pop %v105
    %v108 = vrcp.pop %v106
    %v109 = vmul.f32 %v103, %v107
    %v110 = vmul.f32 %v104, %v108
    %v111 = vmul.f32 %v109, %v109
    %v112 = vmul.f32 %v110, %v110
    %v113 = vmul.f32 %v111, %v99
    %v114 = vmul.f32 %v112, %v100
    %s115 = sadd.s32 0, 0
    %s116 = smul.u32 %s115, 16
    %s117 = sld [smem:[#allocation4]]
    %s118 = sadd.s32 %s116, 16
    %p119 = scmp.le.s32.totalorder %s118, %s117
    // Predicated region
    $region22: #{tpu_custom_call.1} parent=1 // pred_check
      %p120 = pneg %p119
    $region23: #{tpu_custom_call.1} parent=1 // pred_check_branch
      %122 = sbr.rel (%p120) target = $region25
    $region24: #{tpu_custom_call.1} parent=1 // pred_region
      %v123 = vld [vmem:[#allocation2] sm:$0xff]
      %v124 = vadd.f32 %v113, %v114
      %v125 = vadd.f32 %v123, %v124
      %126 = vst [vmem:[#allocation2] sm:$0xff] %v125
    $region25: #{tpu_custom_call.1} parent=1 // pred_fallthru
      _
    %p127 = scmp.gt.s32.totalorder %s118, %s117
    // Predicated region
    $region26: #{tpu_custom_call.1} parent=1 // pred_check
      %p128 = pneg %p127
    $region27: #{tpu_custom_call.1} parent=1 // pred_check_branch
      %130 = sbr.rel (%p128) target = $region29
    $region28: #{tpu_custom_call.1} parent=1 // pred_region
      %v131 = vlaneseq
      %v132 = vshrl.u32 %v131, 7
      %v133 = vadd.s32 %v132, 8
      %v134 = vstv %s116
      %v135 = vadd.s32 %v134, %v132
      %v136 = vadd.s32 %v134, %v133
      %v137 = vld [vmem:[#allocation2] sm:$0xff]
      %v138 = vstv %s117
      %vm139 = vcmp.lt.s32.totalorder %v135, %v138
      %vm140 = vcmp.lt.s32.totalorder %v136, %v138
      %v141 = vsel %vm139, %v113, 0.0
      %v142 = vsel %vm140, %v114, 0.0
      %v143 = vadd.f32 %v141, %v142
      %v144 = vadd.f32 %v137, %v143
      %145 = vst [vmem:[#allocation2] sm:$0xff] %v144
    $region29: #{tpu_custom_call.1} parent=1 // pred_fallthru
      _
    // Predicated region
    $region30: #{tpu_custom_call.1} parent=1 // pred_check
      %p146 = pneg %p54
    $region31: #{tpu_custom_call.1} parent=1 // pred_check_branch
      %148 = sbr.rel (%p146) target = $region33
    $region32: #{tpu_custom_call.1} parent=1 // pred_region
      %v149 = vld [vmem:[#allocation2] sm:$0xff]
      %150 = vst [vmem:[#allocation10] sm:$0xff] %v149
    $region33: #{tpu_custom_call.1} parent=1 // pred_fallthru
      _
    // Predicated region
    $region34: #{tpu_custom_call.1} parent=1 // pred_check
      _
    $region35: #{tpu_custom_call.1} parent=1 // pred_check_branch
      %152 = sbr.rel (0) target = $region37
    $region36: #{tpu_custom_call.1} parent=1 // pred_region
      %s154 = ssub.s32 128, 128
      %155 = vsyncadd [#allocation7], %s154
      %s157 = sshll.u32 [#allocation10], 4
      %s158 = int_to_ptr.vmem [resolvable:$true] %s157
      %160 = dma.vmem_to_hbm [thread:$0]  %s158, 128, %s3, [#allocation7]
    $region37: #{tpu_custom_call.1} parent=1 // pred_fallthru
      _
    // Predicated region
    $region38: #{tpu_custom_call.1} parent=1 // pred_check
      _
    $region39: #{tpu_custom_call.1} parent=1 // pred_check_branch
      %162 = sbr.rel (0) target = $region41
    $region40: #{tpu_custom_call.1} parent=1 // pred_region
      %163 = dma.done [#allocation7], 128
    $region41: #{tpu_custom_call.1} parent=1 // pred_fallthru
      _
    %164 = vsyncpa [#allocation6], 1
    %165 = vsyncpa [#allocation9], 1
    %166 = vsyncpa [#allocation7], 1

</llo_original>
